<compile_context>
chip_gen: v5e
topology: v5e:2x2
jax: 0.10.0
libtpu: 0.0.40
codegen_flags: <defaults>
</compile_context>

<pallas_src>
import functools
import math

import jax
import jax.numpy as jnp
from jax.experimental import pallas as pl
from jax.experimental.pallas import tpu as pltpu


# ----------------------------- config (synthetic) -----------------------------
STATE_SIZE = 32     # Config.state_size
ACTION_SIZE = 8     # Config.action_size
FC1_DIM = 128       # Config.fc1_dim
FC1A_DIM = 128      # Config.fc1a_dim  (must equal FC1_DIM for torch.add(x, y))
FC2_DIM = 128       # Config.fc2_dim


def _round_up(x, m):
    return (x + m - 1) // m * m


# --------------------------------- kernel -------------------------------------
def critic_kernel(s_ref, a_ref, w1s_ref, w1a_ref, b1_ref, w2_ref, b2wq_ref,
                  bq_ref, out_ref):
    """One batch tile of the Critic forward pass.

    s_ref    : (TB, S)         state tile
    a_ref    : (TB, A)         action tile
    w1s_ref  : (S, F1)         fc1s weight
    w1a_ref  : (A, F1)         fc1a weight
    b1_ref   : (2, F1) f32     row 0 = b1s, row 1 = b1a
    w2_ref   : (F1, F2)        fc2 weight
    b2wq_ref : (2, F2) f32     row 0 = b2, row 1 = fc_q weight row
    bq_ref   : (1, 1) in SMEM  fc_q bias (scalar)
    out_ref  : (TB, 1)
    """
    # fc1s / fc1a as two dots with f32 accumulation (no block-diagonal zeros).
    x = jnp.dot(s_ref[...], w1s_ref[...], preferred_element_type=jnp.float32)
    y = jnp.dot(a_ref[...], w1a_ref[...], preferred_element_type=jnp.float32)
    x = jnp.maximum(x + b1_ref[0:1, :], 0.0)
    y = jnp.maximum(y + b1_ref[1:2, :], 0.0)

    # torch.add(x, y)
    xy = x + y

    # fc2 + relu (cast back to weight dtype so the MXU runs at bf16 rate when
    # bf16 packing is used; accumulation stays f32).
    z = jnp.dot(xy.astype(w2_ref.dtype), w2_ref[...],
                preferred_element_type=jnp.float32)
    z = jnp.maximum(z + b2wq_ref[0:1, :], 0.0)

    # fc_q: N=1 projection as elementwise mul + lane reduction (XLU slot),
    # instead of wasting an MXU pass on a single output column.
    q = jnp.sum(z * b2wq_ref[1:2, :], axis=-1, keepdims=True) + bq_ref[0, 0]
    out_ref[...] = q.astype(out_ref.dtype)


# ------------------------------ param packing ---------------------------------
def pack_critic_params(params, dtype=jnp.bfloat16):
    """Repack PyTorch-layout params for the kernel.

    Returns (w1s, w1a, b1, w2, b2wq, bq):
      w1s  : (S, F1)  in `dtype`
      w1a  : (A, F1)  in `dtype`
      b1   : (2, F1)  f32, rows = [b1s, b1a]
      w2   : (F1, F2) in `dtype`
      b2wq : (2, F2)  f32, rows = [b2, fc_q weight row]
      bq   : (1, 1)   f32 scalar (placed in SMEM by the wrapper)

    dtype=jnp.bfloat16 (default) runs the MXU at its native bf16 rate with f32
    accumulation; use dtype=jnp.float32 for bit-accurate comparisons.
    """
    w1s, b1s, w1a, b1a, w2, b2, wq_row, bq = params
    S, F1 = w1s.shape
    A, F1a = w1a.shape
    assert F1 == F1a, "torch.add(x, y) requires fc1_dim == fc1a_dim"
    b1 = jnp.concatenate([b1s, b1a], axis=0).astype(jnp.float32)      # (2, F1)
    b2wq = jnp.concatenate([b2, wq_row], axis=0).astype(jnp.float32)  # (2, F2)
    return (w1s.astype(dtype), w1a.astype(dtype), b1,
            w2.astype(dtype), b2wq, bq.astype(jnp.float32))


# --------------------------------- wrapper -------------------------------------
@functools.partial(jax.jit, static_argnames=("max_block_b",))
def critic_forward(state, action, packed, *, max_block_b=2048):
    w1s, w1a, b1, w2, b2wq, bq = packed
    B, S = state.shape
    A = action.shape[1]
    F1 = w1s.shape[1]
    F2 = w2.shape[1]
    dtype = w1s.dtype

    state = state.astype(dtype)
    action = action.astype(dtype)

    # ---- adaptive batch tiling -------------------------------------------------
    # Tiles up to max_block_b rows (per-grid-step overhead >> per-row compute);
    # keep the grid even and >= 2 when possible so v7x can shard tiles across
    # both TensorCores; pad only up to the chosen tile size (a few rows).
    B8 = _round_up(B, 8)
    if B8 <= 8:
        n_tiles = 1
    else:
        n_tiles = max(2, pl.cdiv(B8, max_block_b))
        n_tiles = _round_up(n_tiles, 2)          # even grid -> both TCs on v7x
    tb = _round_up(pl.cdiv(B8, n_tiles), 8)
    Bp = tb * n_tiles
    if Bp != B:
        state = jnp.pad(state, ((0, Bp - B), (0, 0)))
        action = jnp.pad(action, ((0, Bp - B), (0, 0)))
    grid = (n_tiles,)

    out = pl.pallas_call(
        critic_kernel,
        out_shape=jax.ShapeDtypeStruct((Bp, 1), jnp.float32),
        grid_spec=pltpu.PrefetchScalarGridSpec(
            num_scalar_prefetch=0,
            grid=grid,
            in_specs=[
                # activations: tiled along batch -> pipelined (double-buffered)
                pl.BlockSpec((tb, S), lambda i: (i, 0)),
                pl.BlockSpec((tb, A), lambda i: (i, 0)),
                # weights / biases: grid-invariant -> stay resident in VMEM
                pl.BlockSpec((S, F1), lambda i: (0, 0)),
                pl.BlockSpec((A, F1), lambda i: (0, 0)),
                pl.BlockSpec((2, F1), lambda i: (0, 0)),
                pl.BlockSpec((F1, F2), lambda i: (0, 0)),
                pl.BlockSpec((2, F2), lambda i: (0, 0)),
                # scalar fc_q bias in SMEM (avoids a padded (8,128) VMEM tile)
                pl.BlockSpec(memory_space=pltpu.MemorySpace.SMEM),
            ],
            out_specs=pl.BlockSpec((tb, 1), lambda i: (i, 0)),
        ),
        compiler_params=pltpu.CompilerParams(
            # batch tiles are independent -> shard across TensorCores on v7x
            dimension_semantics=("parallel",),
        ),
    )(state, action, w1s, w1a, b1, w2, b2wq, bq)

    return out[:B]


# ------------------------ deterministic parameter init ------------------------
def init_params(key):
    """Mimics init_ff_layer: uniform(-1/sqrt(out_features), 1/sqrt(out_features))
    for fc1s/fc1a/fc2; fc_q uses PyTorch's default uniform(-1/sqrt(in), 1/sqrt(in))."""
    ks = jax.random.split(key, 8)

    def uni(k, shape, bound):
        return jax.random.uniform(k, shape, jnp.float32, -bound, bound)

    f1s = 1.0 / math.sqrt(FC1_DIM)
    w1s = uni(ks[0], (STATE_SIZE, FC1_DIM), f1s)
    b1s = uni(ks[1], (1, FC1_DIM), f1s)

    f1a = 1.0 / math.sqrt(FC1A_DIM)
    w1a = uni(ks[2], (ACTION_SIZE, FC1A_DIM), f1a)
    b1a = uni(ks[3], (1, FC1A_DIM), f1a)

    f2 = 1.0 / math.sqrt(FC2_DIM)
    w2 = uni(ks[4], (FC1_DIM, FC2_DIM), f2)
    b2 = uni(ks[5], (1, FC2_DIM), f2)

    fq = 1.0 / math.sqrt(FC2_DIM)
    wq_row = uni(ks[6], (1, FC2_DIM), fq)   # fc_q weight as a [1, fc2_dim] row
    bq = uni(ks[7], (1, 1), fq)

    return (w1s, b1s, w1a, b1a, w2, b2, wq_row, bq)


# ------------------------------- reference ------------------------------------
def critic_reference(state, action, params):
    (w1s, b1s, w1a, b1a, w2, b2, wq_row, bq) = params
    x = jax.nn.relu(state @ w1s + b1s)
    y = jax.nn.relu(action @ w1a + b1a)
    z = jax.nn.relu((x + y) @ w2 + b2)
    return z @ wq_row.T + bq


# --------------------------------- main ---------------------------------------
if __name__ == "__main__":
    key = jax.random.PRNGKey(0)
    k_params, k_state, k_action = jax.random.split(key, 3)

    params = init_params(k_params)

    # ---- f32 packing: exact correctness check (small batch, grid=(1,)) -------
    packed_f32 = pack_critic_params(params, dtype=jnp.float32)
    B_small = 8
    state = jax.random.normal(k_state, (B_small, STATE_SIZE), jnp.float32)
    action = jax.random.normal(k_action, (B_small, ACTION_SIZE), jnp.float32)
    q = jax.block_until_ready(critic_forward(state, action, packed_f32))
    q_ref = critic_reference(state, action, params)
    assert q.shape == (B_small, 1), q.shape
    assert jnp.allclose(q, q_ref, atol=2e-5, rtol=2e-5), (q, q_ref)

    # ---- larger batch: multi-tile grid (2 tiles), f32 exact path -------------
    B_big = 512
    k_s2, k_a2 = jax.random.split(jax.random.PRNGKey(1))
    state2 = jax.random.normal(k_s2, (B_big, STATE_SIZE), jnp.float32)
    action2 = jax.random.normal(k_a2, (B_big, ACTION_SIZE), jnp.float32)
    q2_ref = critic_reference(state2, action2, params)

    q2_f32 = jax.block_until_ready(critic_forward(state2, action2, packed_f32))
    assert q2_f32.shape == (B_big, 1), q2_f32.shape
    assert jnp.allclose(q2_f32, q2_ref, atol=2e-5, rtol=2e-5)

    # ---- bf16 packing (default, MXU-rate path); f32 accumulation -------------
    packed_bf16 = pack_critic_params(params)  # dtype=jnp.bfloat16
    q2_bf16 = jax.block_until_ready(critic_forward(state2, action2, packed_bf16))
    assert q2_bf16.shape == (B_big, 1), q2_bf16.shape
    # Loose tolerance: error comes only from bf16 input/weight rounding.
    assert jnp.allclose(q2_bf16, q2_ref, atol=1e-1, rtol=1e-1)

    print("KERNEL_OK")
</pallas_src>

<mosaic_0001>
module attributes {stable_mosaic.version = 11 : i64} {
  func.func @critic_kernel(%arg0: i32, %arg1: memref<8x32xf32, #tpu.memory_space<vmem>>, %arg2: memref<8x8xf32, #tpu.memory_space<vmem>>, %arg3: memref<32x128xf32, #tpu.memory_space<vmem>>, %arg4: memref<8x128xf32, #tpu.memory_space<vmem>>, %arg5: memref<2x128xf32, #tpu.memory_space<vmem>>, %arg6: memref<128x128xf32, #tpu.memory_space<vmem>>, %arg7: memref<2x128xf32, #tpu.memory_space<vmem>>, %arg8: memref<1x1xf32, #tpu.memory_space<smem>>, %arg9: memref<8x1xf32, #tpu.memory_space<vmem>>) attributes {dimension_semantics = [#tpu.dimension_semantics<parallel>], iteration_bounds = array<i64: 1>, scalar_prefetch = 0 : i64, scratch_operands = 0 : i64, tpu.core_type = #tpu.core_type<tc>, window_params = [{transform_indices = @transform_0, window_bounds = array<i64: 8, 32>}, {transform_indices = @transform_1, window_bounds = array<i64: 8, 8>}, {pipeline_mode = #tpu.pipeline_mode<synchronous>, transform_indices = @transform_2, window_bounds = array<i64: 32, 128>}, {pipeline_mode = #tpu.pipeline_mode<synchronous>, transform_indices = @transform_3, window_bounds = array<i64: 8, 128>}, {pipeline_mode = #tpu.pipeline_mode<synchronous>, transform_indices = @transform_4, window_bounds = array<i64: 2, 128>}, {pipeline_mode = #tpu.pipeline_mode<synchronous>, transform_indices = @transform_5, window_bounds = array<i64: 128, 128>}, {pipeline_mode = #tpu.pipeline_mode<synchronous>, transform_indices = @transform_6, window_bounds = array<i64: 2, 128>}, {transform_indices = @transform_7, window_bounds = array<i64: 1, 1>}, {transform_indices = @transform_8, window_bounds = array<i64: 8, 1>}]} {
    %c0 = arith.constant 0 : index
    %c0_0 = arith.constant 0 : index
    %0 = vector.load %arg1[%c0, %c0_0] : memref<8x32xf32, #tpu.memory_space<vmem>>, vector<8x32xf32>
    %c0_1 = arith.constant 0 : index
    %c0_2 = arith.constant 0 : index
    %1 = vector.load %arg3[%c0_1, %c0_2] : memref<32x128xf32, #tpu.memory_space<vmem>>, vector<32x128xf32>
    %cst = arith.constant dense<0.000000e+00> : vector<8x128xf32>
    %2 = tpu.matmul %0, %1, %cst {dimension_numbers = #tpu.dot_dimension_numbers<[1], [0], [0], [1], [0, 0, 1, 1], [], []>} : vector<8x32xf32>, vector<32x128xf32>, vector<8x128xf32> -> vector<8x128xf32>
    %c0_3 = arith.constant 0 : index
    %c0_4 = arith.constant 0 : index
    %3 = vector.load %arg2[%c0_3, %c0_4] : memref<8x8xf32, #tpu.memory_space<vmem>>, vector<8x8xf32>
    %c0_5 = arith.constant 0 : index
    %c0_6 = arith.constant 0 : index
    %4 = vector.load %arg4[%c0_5, %c0_6] : memref<8x128xf32, #tpu.memory_space<vmem>>, vector<8x128xf32>
    %cst_7 = arith.constant dense<0.000000e+00> : vector<8x128xf32>
    %5 = tpu.matmul %3, %4, %cst_7 {dimension_numbers = #tpu.dot_dimension_numbers<[1], [0], [0], [1], [0, 0, 1, 1], [], []>} : vector<8x8xf32>, vector<8x128xf32>, vector<8x128xf32> -> vector<8x128xf32>
    %c0_8 = arith.constant 0 : index
    %c0_9 = arith.constant 0 : index
    %6 = vector.load %arg5[%c0_8, %c0_9] : memref<2x128xf32, #tpu.memory_space<vmem>>, vector<1x128xf32>
    %7 = vector.broadcast %6 : vector<1x128xf32> to vector<8x128xf32>
    %8 = arith.addf %2, %7 : vector<8x128xf32>
    %cst_10 = arith.constant 0.000000e+00 : f32
    %9 = vector.broadcast %cst_10 : f32 to vector<8x128xf32>
    %10 = arith.maximumf %8, %9 : vector<8x128xf32>
    %c1 = arith.constant 1 : index
    %c0_11 = arith.constant 0 : index
    %11 = vector.load %arg5[%c1, %c0_11] : memref<2x128xf32, #tpu.memory_space<vmem>>, vector<1x128xf32>
    %12 = vector.broadcast %11 : vector<1x128xf32> to vector<8x128xf32>
    %13 = arith.addf %5, %12 : vector<8x128xf32>
    %cst_12 = arith.constant 0.000000e+00 : f32
    %14 = vector.broadcast %cst_12 : f32 to vector<8x128xf32>
    %15 = arith.maximumf %13, %14 : vector<8x128xf32>
    %16 = arith.addf %10, %15 : vector<8x128xf32>
    %c0_13 = arith.constant 0 : index
    %c0_14 = arith.constant 0 : index
    %17 = vector.load %arg6[%c0_13, %c0_14] : memref<128x128xf32, #tpu.memory_space<vmem>>, vector<128x128xf32>
    %cst_15 = arith.constant dense<0.000000e+00> : vector<8x128xf32>
    %18 = tpu.matmul %16, %17, %cst_15 {dimension_numbers = #tpu.dot_dimension_numbers<[1], [0], [0], [1], [0, 0, 1, 1], [], []>} : vector<8x128xf32>, vector<128x128xf32>, vector<8x128xf32> -> vector<8x128xf32>
    %c0_16 = arith.constant 0 : index
    %c0_17 = arith.constant 0 : index
    %19 = vector.load %arg7[%c0_16, %c0_17] : memref<2x128xf32, #tpu.memory_space<vmem>>, vector<1x128xf32>
    %20 = vector.broadcast %19 : vector<1x128xf32> to vector<8x128xf32>
    %21 = arith.addf %18, %20 : vector<8x128xf32>
    %cst_18 = arith.constant 0.000000e+00 : f32
    %22 = vector.broadcast %cst_18 : f32 to vector<8x128xf32>
    %23 = arith.maximumf %21, %22 : vector<8x128xf32>
    %c1_19 = arith.constant 1 : index
    %c0_20 = arith.constant 0 : index
    %24 = vector.load %arg7[%c1_19, %c0_20] : memref<2x128xf32, #tpu.memory_space<vmem>>, vector<1x128xf32>
    %25 = vector.broadcast %24 : vector<1x128xf32> to vector<8x128xf32>
    %26 = arith.mulf %23, %25 : vector<8x128xf32>
    %cst_21 = arith.constant dense<0.000000e+00> : vector<8xf32>
    %27 = vector.multi_reduction <add>, %26, %cst_21 [1] : vector<8x128xf32> to vector<8xf32>
    %28 = vector.shape_cast %27 : vector<8xf32> to vector<8x1xf32>
    %c0_22 = arith.constant 0 : index
    %c0_23 = arith.constant 0 : index
    %29 = memref.load %arg8[%c0_22, %c0_23] : memref<1x1xf32, #tpu.memory_space<smem>>
    %30 = vector.broadcast %29 : f32 to vector<8x1xf32>
    %31 = arith.addf %28, %30 : vector<8x1xf32>
    %c0_24 = arith.constant 0 : index
    %c0_25 = arith.constant 0 : index
    %32 = vector.load %arg9[%c0_24, %c0_25] : memref<8x1xf32, #tpu.memory_space<vmem>>, vector<8x1xf32>
    tpu.vector_store %arg9[%c0_24, %c0_25], %31 {strides = array<i32>} : memref<8x1xf32, #tpu.memory_space<vmem>>, vector<8x1xf32>,
    return
  }
  func.func @transform_0(%arg0: i32) -> (i32, i32) {
    %c0_i32 = arith.constant 0 : i32
    %c0_i32_0 = arith.constant 0 : i32
    return %arg0, %c0_i32 : i32, i32
  }
  func.func @transform_1(%arg0: i32) -> (i32, i32) {
    %c0_i32 = arith.constant 0 : i32
    %c0_i32_0 = arith.constant 0 : i32
    return %arg0, %c0_i32 : i32, i32
  }
  func.func @transform_2(%arg0: i32) -> (i32, i32) {
    %c0_i32 = arith.constant 0 : i32
    %c0_i32_0 = arith.constant 0 : i32
    %c0_i32_1 = arith.constant 0 : i32
    return %c0_i32, %c0_i32_0 : i32, i32
  }
  func.func @transform_3(%arg0: i32) -> (i32, i32) {
    %c0_i32 = arith.constant 0 : i32
    %c0_i32_0 = arith.constant 0 : i32
    %c0_i32_1 = arith.constant 0 : i32
    return %c0_i32, %c0_i32_0 : i32, i32
  }
  func.func @transform_4(%arg0: i32) -> (i32, i32) {
    %c0_i32 = arith.constant 0 : i32
    %c0_i32_0 = arith.constant 0 : i32
    %c0_i32_1 = arith.constant 0 : i32
    return %c0_i32, %c0_i32_0 : i32, i32
  }
  func.func @transform_5(%arg0: i32) -> (i32, i32) {
    %c0_i32 = arith.constant 0 : i32
    %c0_i32_0 = arith.constant 0 : i32
    %c0_i32_1 = arith.constant 0 : i32
    return %c0_i32, %c0_i32_0 : i32, i32
  }
  func.func @transform_6(%arg0: i32) -> (i32, i32) {
    %c0_i32 = arith.constant 0 : i32
    %c0_i32_0 = arith.constant 0 : i32
    %c0_i32_1 = arith.constant 0 : i32
    return %c0_i32, %c0_i32_0 : i32, i32
  }
  func.func @transform_7(%arg0: i32) -> (i32, i32) {
    %c0_i32 = arith.constant 0 : i32
    %c0_i32_0 = arith.constant 0 : i32
    %c0_i32_1 = arith.constant 0 : i32
    return %c0_i32, %c0_i32_0 : i32, i32
  }
  func.func @transform_8(%arg0: i32) -> (i32, i32) {
    %c0_i32 = arith.constant 0 : i32
    %c0_i32_0 = arith.constant 0 : i32
    return %arg0, %c0_i32 : i32, i32
  }
}

</mosaic_0001>

<llo_original>
// kernel: critic_forward.1
$region0: #{critic_forward.1}
  #allocation0 [shape = 'u32[]', space=smem, size = 0x4, offset = 0x4, fixed_abs, tag = 'smem constant byte address 0x4 - core index']
  #allocation1 [shape = 'u32[72,128]{1,0:T(1,128)}', space=vmem, size = 0x9000, scoped, tag = 'internal scratch']
  #allocation2 [shape = 'f32[1,1]{1,0:T(1,128)S(6)}', space=smem, size = 0x200, scoped, tag = 'scoped memory for critic_forward.1']
  %s0 = inlined_call_operand.hbm [shape: f32[8,32], index: 0, kind: input, shape index: {}]
  %s1 = inlined_call_operand.hbm [shape: f32[8,8], index: 1, kind: input, shape index: {}]
  %s2 = inlined_call_operand.hbm [shape: f32[32,128], index: 2, kind: input, shape index: {}]
  %s3 = inlined_call_operand.hbm [shape: f32[8,128], index: 3, kind: input, shape index: {}]
  %s4 = inlined_call_operand.vmem [shape: f32[2,128], index: 4, kind: input, shape index: {}]
  %s5 = inlined_call_operand.hbm [shape: f32[128,128], index: 5, kind: input, shape index: {}]
  %s6 = inlined_call_operand.vmem [shape: f32[2,128], index: 6, kind: input, shape index: {}]
  %s7 = inlined_call_operand.<no memory space> [shape: f32[1,1], index: 7, kind: input, shape index: {}]
  %s8 = inlined_call_operand.vmem [shape: f32[8,1], index: 8, kind: output, shape index: {}]
  %s9 = sld [smem:[#allocation0]]
  $region62: #{critic_forward.1} parent=0
    _
  %s11 = ssub.s32 1, %s9
  %s12 = scalar_select 0, %s11, %s9
  %13 = sst [smem:[#allocation2]] %s7
  $region1: #{critic_forward.1} parent=0
    #allocation3 [shape = 'u8[4096]{0}', space=vmem, size = 0x1000, scoped, tag = 'input window, operand 0, single buffered']
    #allocation4 [shape = 's32[1]{0}', space=sflag, size = 0x4, scoped, tag = 'scoped memory for critic_forward.1']
    #allocation5 [shape = 'u8[4096]{0}', space=vmem, size = 0x1000, scoped, tag = 'input window, operand 1, single buffered']
    #allocation6 [shape = 's32[1]{0}', space=sflag, size = 0x4, scoped, tag = 'scoped memory for critic_forward.1']
    #allocation7 [shape = 'u8[16384]{0}', space=vmem, size = 0x4000, scoped, tag = 'input window, operand 2, single buffered']
    #allocation8 [shape = 'u8[4096]{0}', space=vmem, size = 0x1000, scoped, tag = 'input window, operand 3, single buffered']
    #allocation9 [shape = 's32[1]{0}', space=sflag, size = 0x4, scoped, tag = 'scoped memory for critic_forward.1']
    #allocation10 [shape = 'u8[65536]{0}', space=vmem, size = 0x10000, scoped, tag = 'input window, operand 5, single buffered']
    %14 = vsyncpa [#allocation4], 0
    %15 = vsyncpa [#allocation6], 0
    %16 = vsyncpa [#allocation9], 0
    // Predicated region
    $region2: #{critic_forward.1} parent=1 // pred_check
      _
    $region3: #{critic_forward.1} parent=1 // pred_check_branch
      %18 = sbr.rel (0) target = $region5
    $region4: #{critic_forward.1} parent=1 // pred_region
      %20 = vsyncadd [#allocation4], 0
      %s22 = sshll.u32 %s0, 4
      %s23 = int_to_ptr.hbm [resolvable:$true] %s22
      %s24 = sshll.u32 [#allocation3], 4
      %s25 = int_to_ptr.vmem [resolvable:$true] %s24
      %27 = dma.hbm_to_vmem [thread:$0]  %s23, 128, %s25, [#allocation4]
    $region5: #{critic_forward.1} parent=1 // pred_fallthru
      _
    // Predicated region
    $region6: #{critic_forward.1} parent=1 // pred_check
      _
    $region7: #{critic_forward.1} parent=1 // pred_check_branch
      %29 = sbr.rel (0) target = $region9
    $region8: #{critic_forward.1} parent=1 // pred_region
      %31 = vsyncadd [#allocation6], 0
      %s33 = sshll.u32 %s1, 4
      %s34 = int_to_ptr.hbm [resolvable:$true] %s33
      %s35 = sshll.u32 [#allocation5], 4
      %s36 = int_to_ptr.vmem [resolvable:$true] %s35
      %38 = dma.hbm_to_vmem [thread:$0]  %s34, 128, %s36, [#allocation6]
    $region9: #{critic_forward.1} parent=1 // pred_fallthru
      _
    // Predicated region
    $region10: #{critic_forward.1} parent=1 // pred_check
      _
    $region11: #{critic_forward.1} parent=1 // pred_check_branch
      %40 = sbr.rel (0) target = $region13
    $region12: #{critic_forward.1} parent=1 // pred_region
      %42 = vsyncadd [#allocation6], 0
      %s43 = sshll.u32 %s2, 4
      %s44 = int_to_ptr.hbm [resolvable:$true] %s43
      %s45 = sshll.u32 [#allocation7], 4
      %s46 = int_to_ptr.vmem [resolvable:$true] %s45
      %51 = dma.hbm_to_vmem [thread:$0]  %s44, 512, %s46, [#allocation6], 128, 128, 8
    $region13: #{critic_forward.1} parent=1 // pred_fallthru
      _
    // Predicated region
    $region14: #{critic_forward.1} parent=1 // pred_check
      _
    $region15: #{critic_forward.1} parent=1 // pred_check_branch
      %53 = sbr.rel (0) target = $region17
    $region16: #{critic_forward.1} parent=1 // pred_region
      %55 = vsyncadd [#allocation9], 0
      %s57 = sshll.u32 %s3, 4
      %s58 = int_to_ptr.hbm [resolvable:$true] %s57
      %s59 = sshll.u32 [#allocation8], 4
      %s60 = int_to_ptr.vmem [resolvable:$true] %s59
      %62 = dma.hbm_to_vmem [thread:$0]  %s58, 128, %s60, [#allocation9]
    $region17: #{critic_forward.1} parent=1 // pred_fallthru
      _
    // Predicated region
    $region18: #{critic_forward.1} parent=1 // pred_check
      _
    $region19: #{critic_forward.1} parent=1 // pred_check_branch
      %64 = sbr.rel (0) target = $region21
    $region20: #{critic_forward.1} parent=1 // pred_region
      _
    $region21: #{critic_forward.1} parent=1 // pred_fallthru
      _
    // Predicated region
    $region22: #{critic_forward.1} parent=1 // pred_check
      _
    $region23: #{critic_forward.1} parent=1 // pred_check_branch
      %66 = sbr.rel (0) target = $region25
    $region24: #{critic_forward.1} parent=1 // pred_region
      %68 = vsyncadd [#allocation9], 0
      %s69 = sshll.u32 %s5, 4
      %s70 = int_to_ptr.hbm [resolvable:$true] %s69
      %s71 = sshll.u32 [#allocation10], 4
      %s72 = int_to_ptr.vmem [resolvable:$true] %s71
      %77 = dma.hbm_to_vmem [thread:$0]  %s70, 2048, %s72, [#allocation9], 128, 128, 8
    $region25: #{critic_forward.1} parent=1 // pred_fallthru
      _
    // Predicated region
    $region26: #{critic_forward.1} parent=1 // pred_check
      _
    $region27: #{critic_forward.1} parent=1 // pred_check_branch
      %79 = sbr.rel (0) target = $region29
    $region28: #{critic_forward.1} parent=1 // pred_region
      _
    $region29: #{critic_forward.1} parent=1 // pred_fallthru
      _
    // Predicated region
    $region30: #{critic_forward.1} parent=1 // pred_check
      _
    $region31: #{critic_forward.1} parent=1 // pred_check_branch
      %81 = sbr.rel (0) target = $region33
    $region32: #{critic_forward.1} parent=1 // pred_region
      _
    $region33: #{critic_forward.1} parent=1 // pred_fallthru
      _
    // Predicated region
    $region34: #{critic_forward.1} parent=1 // pred_check
      _
    $region35: #{critic_forward.1} parent=1 // pred_check_branch
      %83 = sbr.rel (0) target = $region37
    $region36: #{critic_forward.1} parent=1 // pred_region
      %85 = dma.done [#allocation4], 128
    $region37: #{critic_forward.1} parent=1 // pred_fallthru
      _
    // Predicated region
    $region38: #{critic_forward.1} parent=1 // pred_check
      _
    $region39: #{critic_forward.1} parent=1 // pred_check_branch
      %87 = sbr.rel (0) target = $region41
    $region40: #{critic_forward.1} parent=1 // pred_region
      %89 = dma.done [#allocation6], 128
    $region41: #{critic_forward.1} parent=1 // pred_fallthru
      _
    // Predicated region
    $region42: #{critic_forward.1} parent=1 // pred_check
      _
    $region43: #{critic_forward.1} parent=1 // pred_check_branch
      %91 = sbr.rel (0) target = $region45
    $region44: #{critic_forward.1} parent=1 // pred_region
      %93 = dma.done [#allocation6], 512
    $region45: #{critic_forward.1} parent=1 // pred_fallthru
      _
    // Predicated region
    $region46: #{critic_forward.1} parent=1 // pred_check
      _
    $region47: #{critic_forward.1} parent=1 // pred_check_branch
      %95 = sbr.rel (0) target = $region49
    $region48: #{critic_forward.1} parent=1 // pred_region
      %97 = dma.done [#allocation9], 128
    $region49: #{critic_forward.1} parent=1 // pred_fallthru
      _
    // Predicated region
    $region50: #{critic_forward.1} parent=1 // pred_check
      _
    $region51: #{critic_forward.1} parent=1 // pred_check_branch
      %99 = sbr.rel (0) target = $region53
    $region52: #{critic_forward.1} parent=1 // pred_region
      %101 = dma.done [#allocation9], 2048
    $region53: #{critic_forward.1} parent=1 // pred_fallthru
      _
    %v102 = vld [vmem:[#allocation3] sm:$0xff]
    %v103 = vld [vmem:[#allocation7] sm:$0xff]
    %v104 = vld [vmem:[#allocation7 + $0x8] sm:$0xff]
    %v105 = vld [vmem:[#allocation7 + $0x10] sm:$0xff]
    %v106 = vld [vmem:[#allocation7 + $0x18] sm:$0xff]
    %v107 = vld [vmem:[#allocation5] sm:$0xff]
    %v108 = vld [vmem:[#allocation8] sm:$0xff]
    %v109 = vld [vmem:[%s4] sm:$0x1]
    %v110 = vperm.slane %v109, 0
    %vm111 = vcmask 261120
    %v113 = vsel %vm111, %v102, 0
    %115 = vmatpush.msra.mxu0 0.0
    %116 = vmatpush.msra.mxu0 0.0
    %117 = vmatpush.msra.mxu0 0.0
    %118 = vmatpush.msra.mxu0 0.0
    %119 = vmatpush.msra.mxu0 0.0
    %120 = vmatpush.msra.mxu0 0.0
    %121 = vmatpush.msra.mxu0 0.0
    %122 = vmatpush.msra.mxu0 0.0
    %123 = vmatpush.msra.mxu0 0.0
    %124 = vmatpush.msra.mxu0 0.0
    %125 = vmatpush.msra.mxu0 0.0
    %126 = vmatpush.msra.mxu0 0.0
    %127 = vmatpush.msra.mxu0 %v106
    %128 = vmatpush.msra.mxu0 %v105
    %129 = vmatpush.msra.mxu0 %v104
    %130 = vmatpush.msra.mxu0 %v103
    %131 = vmatmul.f32.gmra.mxu0 %v113
    %v132 = vpop.f32.mrf.mxu0
    %v133 = vadd.f32 %v110, %v132
    %134 = vdwg.mxu0
    %v135 = vmax.f32 %v133, 0.0
    %v136 = vld [vmem:[%s4 + $0x1] sm:$0x1]
    %v137 = vperm.slane %v136, 0
    %vm138 = vcmask 64512
    %v140 = vsel %vm138, %v107, 0
    %142 = vmatpush.msra.mxu0 0.0
    %143 = vmatpush.msra.mxu0 0.0
    %144 = vmatpush.msra.mxu0 0.0
    %145 = vmatpush.msra.mxu0 0.0
    %146 = vmatpush.msra.mxu0 0.0
    %147 = vmatpush.msra.mxu0 0.0
    %148 = vmatpush.msra.mxu0 0.0
    %149 = vmatpush.msra.mxu0 0.0
    %150 = vmatpush.msra.mxu0 0.0
    %151 = vmatpush.msra.mxu0 0.0
    %152 = vmatpush.msra.mxu0 0.0
    %153 = vmatpush.msra.mxu0 0.0
    %154 = vmatpush.msra.mxu0 0.0
    %155 = vmatpush.msra.mxu0 0.0
    %156 = vmatpush.msra.mxu0 0.0
    %157 = vmatpush.msra.mxu0 %v108
    %158 = vmatmul.f32.gmra.mxu0 %v140
    %v159 = vpop.f32.mrf.mxu0
    %v160 = vadd.f32 %v137, %v159
    %161 = vdwg.mxu0
    %v162 = vmax.f32 %v160, 0.0
    %v163 = vadd.f32 %v135, %v162
    %v164 = vld [vmem:[#allocation10] sm:$0xff]
    %v165 = vld [vmem:[#allocation10 + $0x8] sm:$0xff]
    %v166 = vld [vmem:[#allocation10 + $0x10] sm:$0xff]
    %v167 = vld [vmem:[#allocation10 + $0x18] sm:$0xff]
    %v168 = vld [vmem:[#allocation10 + $0x20] sm:$0xff]
    %v169 = vld [vmem:[#allocation10 + $0x28] sm:$0xff]
    %v170 = vld [vmem:[#allocation10 + $0x30] sm:$0xff]
    %v171 = vld [vmem:[#allocation10 + $0x38] sm:$0xff]
    %v172 = vld [vmem:[#allocation10 + $0x40] sm:$0xff]
    %v173 = vld [vmem:[#allocation10 + $0x48] sm:$0xff]
    %v174 = vld [vmem:[#allocation10 + $0x50] sm:$0xff]
    %v175 = vld [vmem:[#allocation10 + $0x58] sm:$0xff]
    %v176 = vld [vmem:[#allocation10 + $0x60] sm:$0xff]
    %v177 = vld [vmem:[#allocation10 + $0x68] sm:$0xff]
    %v178 = vld [vmem:[#allocation10 + $0x70] sm:$0xff]
    %v179 = vld [vmem:[#allocation10 + $0x78] sm:$0xff]
    %v180 = vld [vmem:[%s6] sm:$0x1]
    %v181 = vperm.slane %v180, 0
    %182 = vmatpush.msra.mxu0 %v179
    %183 = vmatpush.msra.mxu0 %v178
    %184 = vmatpush.msra.mxu0 %v177
    %185 = vmatpush.msra.mxu0 %v176
    %186 = vmatpush.msra.mxu0 %v175
    %187 = vmatpush.msra.mxu0 %v174
    %188 = vmatpush.msra.mxu0 %v173
    %189 = vmatpush.msra.mxu0 %v172
    %190 = vmatpush.msra.mxu0 %v171
    %191 = vmatpush.msra.mxu0 %v170
    %192 = vmatpush.msra.mxu0 %v169
    %193 = vmatpush.msra.mxu0 %v168
    %194 = vmatpush.msra.mxu0 %v167
    %195 = vmatpush.msra.mxu0 %v166
    %196 = vmatpush.msra.mxu0 %v165
    %197 = vmatpush.msra.mxu0 %v164
    %198 = vmatmul.f32.gmra.mxu0 %v163
    %v199 = vpop.f32.mrf.mxu0
    %v200 = vadd.f32 %v181, %v199
    %201 = vdwg.mxu0
    %v202 = vmax.f32 %v200, 0.0
    %v203 = vld [vmem:[%s6 + $0x1] sm:$0x1]
    %v204 = vperm.slane %v203, 0
    %v205 = vmul.f32 %v202, %v204
    %206 = vadd.xlane.f32.xlu0 %v205
    %v207 = vpop.xlane.xlu0 %206
    %s208 = sld [smem:[#allocation2]]
    %v209 = vstv %s208
    %v210 = vadd.f32 %v207, %v209
    %vm211 = vcmask 7168
    %212 = vst.msk [vmem:[%s8] sm:$0xff] %vm211, %v210
    // Predicated region
    $region54: #{critic_forward.1} parent=1 // pred_check
      _
    $region55: #{critic_forward.1} parent=1 // pred_check_branch
      %214 = sbr.rel (0) target = $region57
    $region56: #{critic_forward.1} parent=1 // pred_region
      _
    $region57: #{critic_forward.1} parent=1 // pred_fallthru
      _
    // Predicated region
    $region58: #{critic_forward.1} parent=1 // pred_check
      _
    $region59: #{critic_forward.1} parent=1 // pred_check_branch
      %216 = sbr.rel (0) target = $region61
    $region60: #{critic_forward.1} parent=1 // pred_region
      _
    $region61: #{critic_forward.1} parent=1 // pred_fallthru
      _
    %217 = vsyncpa [#allocation4], 1
    %218 = vsyncpa [#allocation6], 1
    %219 = vsyncpa [#allocation9], 1

</llo_original>
